<compile_context>
chip_gen: v6e
topology: v6e:2x2x1
jax: 0.10.0
libtpu: 0.0.40
codegen_flags: <defaults>
</compile_context>

<pallas_src>
import jax
import jax.numpy as jnp
from jax.experimental import pallas as pl
from jax.experimental.pallas import tpu as pltpu


# ---------------------------------------------------------------------------
# Packed parameter layout (1-D f32, row-major per tensor):
#   w2: (6,4)  -> [ 0, 24)    b2: (4,) -> [24, 28)
#   w3: (4,1)  -> [28, 32)    b3: (1,) -> [32, 33)
#   w5: (1,3)  -> [33, 36)    b5: (3,) -> [36, 39)
#   w7: (3,6)  -> [39, 57)    b7: (6,) -> [57, 63)
# ---------------------------------------------------------------------------
W2_OFF, B2_OFF = 0, 24
W3_OFF, B3_OFF = 28, 32
W5_OFF, B5_OFF = 33, 36
W7_OFF, B7_OFF = 39, 57
N_PARAMS = 63


def mlp_kernel(p_ref, xT_ref, oT_ref):
    """p_ref: SMEM f32[63]; xT_ref: VMEM (6, Bt); oT_ref: VMEM (6, Bt)."""
    x = xT_ref[...]  # (6, Bt), batch in lanes

    def p(i):  # scalar parameter read from SMEM
        return p_ref[i]

    # layer2: Linear(6, 4)   v1[j, :] = sum_k x[k, :] * w2[k, j] + b2[j]
    v1_rows = []
    for j in range(4):
        acc = x[0:1, :] * p(W2_OFF + 0 * 4 + j)
        for k in range(1, 6):
            acc = acc + x[k:k + 1, :] * p(W2_OFF + k * 4 + j)
        v1_rows.append(acc + p(B2_OFF + j))

    # layer3: Linear(4, 1)   v2 = sum_j v1[j, :] * w3[j, 0] + b3
    v2 = v1_rows[0] * p(W3_OFF + 0)
    for j in range(1, 4):
        v2 = v2 + v1_rows[j] * p(W3_OFF + j)
    v2 = v2 + p(B3_OFF)

    # layer4: ReLU
    v3 = jnp.maximum(v2, 0.0)

    # layer5 + layer6: Linear(1, 3) then Sigmoid (rank-1 broadcast, EUP sigmoid)
    v5_rows = [jax.nn.sigmoid(v3 * p(W5_OFF + m) + p(B5_OFF + m)) for m in range(3)]

    # layer7: Linear(3, 6)   v6[n, :] = sum_m v5[m, :] * w7[m, n] + b7[n]
    out_rows = []
    for n in range(6):
        acc = v5_rows[0] * p(W7_OFF + 0 * 6 + n)
        for m in range(1, 3):
            acc = acc + v5_rows[m] * p(W7_OFF + m * 6 + n)
        out_rows.append(acc + p(B7_OFF + n))

    oT_ref[...] = jnp.concatenate(out_rows, axis=0).astype(oT_ref.dtype)


def pack_params(params):
    """Flatten the 8 weight/bias arrays into one contiguous f32 buffer."""
    (w2, b2, w3, b3, w5, b5, w7, b7) = params
    flat = jnp.concatenate([
        w2.reshape(-1), b2.reshape(-1),
        w3.reshape(-1), b3.reshape(-1),
        w5.reshape(-1), b5.reshape(-1),
        w7.reshape(-1), b7.reshape(-1),
    ]).astype(jnp.float32)
    assert flat.shape[0] == N_PARAMS
    return flat


def mlp_forward(x, params):
    """x: (B, 6) f32. Returns (B, 6) f32."""
    packed = pack_params(params)
    B = x.shape[0]

    # Pad batch (lane axis) to a multiple of 128; pick a lane block that divides it.
    B_pad = pl.cdiv(B, 128) * 128
    Bt = 128
    for cand in (2048, 1024, 512, 256):
        if B_pad % cand == 0:
            Bt = cand
            break

    xT = jnp.pad(x.astype(jnp.float32).T, ((0, 0), (0, B_pad - B)))  # (6, B_pad)

    oT = pl.pallas_call(
        mlp_kernel,
        out_shape=jax.ShapeDtypeStruct((6, B_pad), jnp.float32),
        grid=(B_pad // Bt,),
        in_specs=[
            pl.BlockSpec(memory_space=pltpu.MemorySpace.SMEM),   # packed params
            pl.BlockSpec((6, Bt), lambda i: (0, i)),             # x^T batch tile
        ],
        out_specs=pl.BlockSpec((6, Bt), lambda i: (0, i)),
        compiler_params=pltpu.CompilerParams(
            dimension_semantics=("parallel",)),
    )(packed, xT)

    return oT[:, :B].T  # back to (B, 6)


def init_linear(key, fan_in, fan_out):
    # Mimic torch.nn.Linear default init: U(-1/sqrt(fan_in), 1/sqrt(fan_in)).
    kw, kb = jax.random.split(key)
    bound = 1.0 / jnp.sqrt(fan_in)
    # store weight as (in, out) so forward is x @ W (== torch x @ W.T)
    w = jax.random.uniform(kw, (fan_in, fan_out), jnp.float32, -bound, bound)
    b = jax.random.uniform(kb, (1, fan_out), jnp.float32, -bound, bound)
    return w, b


def reference_forward(x, params):
    (w2, b2, w3, b3, w5, b5, w7, b7) = params
    v1 = x @ w2 + b2
    v2 = v1 @ w3 + b3
    v3 = jnp.maximum(v2, 0.0)
    v4 = v3 @ w5 + b5
    v5 = jax.nn.sigmoid(v4)
    v6 = v5 @ w7 + b7
    return v6


if __name__ == "__main__":
    key = jax.random.PRNGKey(0)
    kx, k2, k3, k5, k7 = jax.random.split(key, 5)

    x1 = jax.random.normal(kx, (2, 6), jnp.float32)

    w2, b2 = init_linear(k2, 6, 4)
    w3, b3 = init_linear(k3, 4, 1)
    w5, b5 = init_linear(k5, 1, 3)
    w7, b7 = init_linear(k7, 3, 6)
    params = (w2, b2, w3, b3, w5, b5, w7, b7)

    out = mlp_forward(x1, params)
    out = jax.block_until_ready(out)

    ref = reference_forward(x1, params)
    assert out.shape == (2, 6)
    assert jnp.allclose(out, ref, atol=1e-5, rtol=1e-5)

    print("KERNEL_OK")
</pallas_src>

<mosaic_0001>
module attributes {stable_mosaic.version = 11 : i64} {
  func.func @mlp_kernel(%arg0: i32, %arg1: memref<63xf32, #tpu.memory_space<smem>>, %arg2: memref<6x128xf32, #tpu.memory_space<vmem>>, %arg3: memref<6x128xf32, #tpu.memory_space<vmem>>) attributes {dimension_semantics = [#tpu.dimension_semantics<parallel>], iteration_bounds = array<i64: 1>, scalar_prefetch = 0 : i64, scratch_operands = 0 : i64, tpu.core_type = #tpu.core_type<tc>, window_params = [{transform_indices = @transform_0, window_bounds = array<i64: 63>}, {transform_indices = @transform_1, window_bounds = array<i64: 6, 128>}, {transform_indices = @transform_2, window_bounds = array<i64: 6, 128>}]} {
    %c0 = arith.constant 0 : index
    %c0_0 = arith.constant 0 : index
    %0 = vector.load %arg2[%c0, %c0_0] : memref<6x128xf32, #tpu.memory_space<vmem>>, vector<6x128xf32>
    %1 = vector.extract_strided_slice %0 {offsets = [0, 0], sizes = [1, 128], strides = [1, 1]} : vector<6x128xf32> to vector<1x128xf32>
    %c0_1 = arith.constant 0 : index
    %2 = memref.load %arg1[%c0_1] : memref<63xf32, #tpu.memory_space<smem>>
    %3 = vector.broadcast %2 : f32 to vector<1x128xf32>
    %4 = arith.mulf %1, %3 : vector<1x128xf32>
    %5 = vector.extract_strided_slice %0 {offsets = [1, 0], sizes = [1, 128], strides = [1, 1]} : vector<6x128xf32> to vector<1x128xf32>
    %c4 = arith.constant 4 : index
    %6 = memref.load %arg1[%c4] : memref<63xf32, #tpu.memory_space<smem>>
    %7 = vector.broadcast %6 : f32 to vector<1x128xf32>
    %8 = arith.mulf %5, %7 : vector<1x128xf32>
    %9 = arith.addf %4, %8 : vector<1x128xf32>
    %10 = vector.extract_strided_slice %0 {offsets = [2, 0], sizes = [1, 128], strides = [1, 1]} : vector<6x128xf32> to vector<1x128xf32>
    %c8 = arith.constant 8 : index
    %11 = memref.load %arg1[%c8] : memref<63xf32, #tpu.memory_space<smem>>
    %12 = vector.broadcast %11 : f32 to vector<1x128xf32>
    %13 = arith.mulf %10, %12 : vector<1x128xf32>
    %14 = arith.addf %9, %13 : vector<1x128xf32>
    %15 = vector.extract_strided_slice %0 {offsets = [3, 0], sizes = [1, 128], strides = [1, 1]} : vector<6x128xf32> to vector<1x128xf32>
    %c12 = arith.constant 12 : index
    %16 = memref.load %arg1[%c12] : memref<63xf32, #tpu.memory_space<smem>>
    %17 = vector.broadcast %16 : f32 to vector<1x128xf32>
    %18 = arith.mulf %15, %17 : vector<1x128xf32>
    %19 = arith.addf %14, %18 : vector<1x128xf32>
    %20 = vector.extract_strided_slice %0 {offsets = [4, 0], sizes = [1, 128], strides = [1, 1]} : vector<6x128xf32> to vector<1x128xf32>
    %c16 = arith.constant 16 : index
    %21 = memref.load %arg1[%c16] : memref<63xf32, #tpu.memory_space<smem>>
    %22 = vector.broadcast %21 : f32 to vector<1x128xf32>
    %23 = arith.mulf %20, %22 : vector<1x128xf32>
    %24 = arith.addf %19, %23 : vector<1x128xf32>
    %25 = vector.extract_strided_slice %0 {offsets = [5, 0], sizes = [1, 128], strides = [1, 1]} : vector<6x128xf32> to vector<1x128xf32>
    %c20 = arith.constant 20 : index
    %26 = memref.load %arg1[%c20] : memref<63xf32, #tpu.memory_space<smem>>
    %27 = vector.broadcast %26 : f32 to vector<1x128xf32>
    %28 = arith.mulf %25, %27 : vector<1x128xf32>
    %29 = arith.addf %24, %28 : vector<1x128xf32>
    %c24 = arith.constant 24 : index
    %30 = memref.load %arg1[%c24] : memref<63xf32, #tpu.memory_space<smem>>
    %31 = vector.broadcast %30 : f32 to vector<1x128xf32>
    %32 = arith.addf %29, %31 : vector<1x128xf32>
    %33 = vector.extract_strided_slice %0 {offsets = [0, 0], sizes = [1, 128], strides = [1, 1]} : vector<6x128xf32> to vector<1x128xf32>
    %c1 = arith.constant 1 : index
    %34 = memref.load %arg1[%c1] : memref<63xf32, #tpu.memory_space<smem>>
    %35 = vector.broadcast %34 : f32 to vector<1x128xf32>
    %36 = arith.mulf %33, %35 : vector<1x128xf32>
    %37 = vector.extract_strided_slice %0 {offsets = [1, 0], sizes = [1, 128], strides = [1, 1]} : vector<6x128xf32> to vector<1x128xf32>
    %c5 = arith.constant 5 : index
    %38 = memref.load %arg1[%c5] : memref<63xf32, #tpu.memory_space<smem>>
    %39 = vector.broadcast %38 : f32 to vector<1x128xf32>
    %40 = arith.mulf %37, %39 : vector<1x128xf32>
    %41 = arith.addf %36, %40 : vector<1x128xf32>
    %42 = vector.extract_strided_slice %0 {offsets = [2, 0], sizes = [1, 128], strides = [1, 1]} : vector<6x128xf32> to vector<1x128xf32>
    %c9 = arith.constant 9 : index
    %43 = memref.load %arg1[%c9] : memref<63xf32, #tpu.memory_space<smem>>
    %44 = vector.broadcast %43 : f32 to vector<1x128xf32>
    %45 = arith.mulf %42, %44 : vector<1x128xf32>
    %46 = arith.addf %41, %45 : vector<1x128xf32>
    %47 = vector.extract_strided_slice %0 {offsets = [3, 0], sizes = [1, 128], strides = [1, 1]} : vector<6x128xf32> to vector<1x128xf32>
    %c13 = arith.constant 13 : index
    %48 = memref.load %arg1[%c13] : memref<63xf32, #tpu.memory_space<smem>>
    %49 = vector.broadcast %48 : f32 to vector<1x128xf32>
    %50 = arith.mulf %47, %49 : vector<1x128xf32>
    %51 = arith.addf %46, %50 : vector<1x128xf32>
    %52 = vector.extract_strided_slice %0 {offsets = [4, 0], sizes = [1, 128], strides = [1, 1]} : vector<6x128xf32> to vector<1x128xf32>
    %c17 = arith.constant 17 : index
    %53 = memref.load %arg1[%c17] : memref<63xf32, #tpu.memory_space<smem>>
    %54 = vector.broadcast %53 : f32 to vector<1x128xf32>
    %55 = arith.mulf %52, %54 : vector<1x128xf32>
    %56 = arith.addf %51, %55 : vector<1x128xf32>
    %57 = vector.extract_strided_slice %0 {offsets = [5, 0], sizes = [1, 128], strides = [1, 1]} : vector<6x128xf32> to vector<1x128xf32>
    %c21 = arith.constant 21 : index
    %58 = memref.load %arg1[%c21] : memref<63xf32, #tpu.memory_space<smem>>
    %59 = vector.broadcast %58 : f32 to vector<1x128xf32>
    %60 = arith.mulf %57, %59 : vector<1x128xf32>
    %61 = arith.addf %56, %60 : vector<1x128xf32>
    %c25 = arith.constant 25 : index
    %62 = memref.load %arg1[%c25] : memref<63xf32, #tpu.memory_space<smem>>
    %63 = vector.broadcast %62 : f32 to vector<1x128xf32>
    %64 = arith.addf %61, %63 : vector<1x128xf32>
    %65 = vector.extract_strided_slice %0 {offsets = [0, 0], sizes = [1, 128], strides = [1, 1]} : vector<6x128xf32> to vector<1x128xf32>
    %c2 = arith.constant 2 : index
    %66 = memref.load %arg1[%c2] : memref<63xf32, #tpu.memory_space<smem>>
    %67 = vector.broadcast %66 : f32 to vector<1x128xf32>
    %68 = arith.mulf %65, %67 : vector<1x128xf32>
    %69 = vector.extract_strided_slice %0 {offsets = [1, 0], sizes = [1, 128], strides = [1, 1]} : vector<6x128xf32> to vector<1x128xf32>
    %c6 = arith.constant 6 : index
    %70 = memref.load %arg1[%c6] : memref<63xf32, #tpu.memory_space<smem>>
    %71 = vector.broadcast %70 : f32 to vector<1x128xf32>
    %72 = arith.mulf %69, %71 : vector<1x128xf32>
    %73 = arith.addf %68, %72 : vector<1x128xf32>
    %74 = vector.extract_strided_slice %0 {offsets = [2, 0], sizes = [1, 128], strides = [1, 1]} : vector<6x128xf32> to vector<1x128xf32>
    %c10 = arith.constant 10 : index
    %75 = memref.load %arg1[%c10] : memref<63xf32, #tpu.memory_space<smem>>
    %76 = vector.broadcast %75 : f32 to vector<1x128xf32>
    %77 = arith.mulf %74, %76 : vector<1x128xf32>
    %78 = arith.addf %73, %77 : vector<1x128xf32>
    %79 = vector.extract_strided_slice %0 {offsets = [3, 0], sizes = [1, 128], strides = [1, 1]} : vector<6x128xf32> to vector<1x128xf32>
    %c14 = arith.constant 14 : index
    %80 = memref.load %arg1[%c14] : memref<63xf32, #tpu.memory_space<smem>>
    %81 = vector.broadcast %80 : f32 to vector<1x128xf32>
    %82 = arith.mulf %79, %81 : vector<1x128xf32>
    %83 = arith.addf %78, %82 : vector<1x128xf32>
    %84 = vector.extract_strided_slice %0 {offsets = [4, 0], sizes = [1, 128], strides = [1, 1]} : vector<6x128xf32> to vector<1x128xf32>
    %c18 = arith.constant 18 : index
    %85 = memref.load %arg1[%c18] : memref<63xf32, #tpu.memory_space<smem>>
    %86 = vector.broadcast %85 : f32 to vector<1x128xf32>
    %87 = arith.mulf %84, %86 : vector<1x128xf32>
    %88 = arith.addf %83, %87 : vector<1x128xf32>
    %89 = vector.extract_strided_slice %0 {offsets = [5, 0], sizes = [1, 128], strides = [1, 1]} : vector<6x128xf32> to vector<1x128xf32>
    %c22 = arith.constant 22 : index
    %90 = memref.load %arg1[%c22] : memref<63xf32, #tpu.memory_space<smem>>
    %91 = vector.broadcast %90 : f32 to vector<1x128xf32>
    %92 = arith.mulf %89, %91 : vector<1x128xf32>
    %93 = arith.addf %88, %92 : vector<1x128xf32>
    %c26 = arith.constant 26 : index
    %94 = memref.load %arg1[%c26] : memref<63xf32, #tpu.memory_space<smem>>
    %95 = vector.broadcast %94 : f32 to vector<1x128xf32>
    %96 = arith.addf %93, %95 : vector<1x128xf32>
    %97 = vector.extract_strided_slice %0 {offsets = [0, 0], sizes = [1, 128], strides = [1, 1]} : vector<6x128xf32> to vector<1x128xf32>
    %c3 = arith.constant 3 : index
    %98 = memref.load %arg1[%c3] : memref<63xf32, #tpu.memory_space<smem>>
    %99 = vector.broadcast %98 : f32 to vector<1x128xf32>
    %100 = arith.mulf %97, %99 : vector<1x128xf32>
    %101 = vector.extract_strided_slice %0 {offsets = [1, 0], sizes = [1, 128], strides = [1, 1]} : vector<6x128xf32> to vector<1x128xf32>
    %c7 = arith.constant 7 : index
    %102 = memref.load %arg1[%c7] : memref<63xf32, #tpu.memory_space<smem>>
    %103 = vector.broadcast %102 : f32 to vector<1x128xf32>
    %104 = arith.mulf %101, %103 : vector<1x128xf32>
    %105 = arith.addf %100, %104 : vector<1x128xf32>
    %106 = vector.extract_strided_slice %0 {offsets = [2, 0], sizes = [1, 128], strides = [1, 1]} : vector<6x128xf32> to vector<1x128xf32>
    %c11 = arith.constant 11 : index
    %107 = memref.load %arg1[%c11] : memref<63xf32, #tpu.memory_space<smem>>
    %108 = vector.broadcast %107 : f32 to vector<1x128xf32>
    %109 = arith.mulf %106, %108 : vector<1x128xf32>
    %110 = arith.addf %105, %109 : vector<1x128xf32>
    %111 = vector.extract_strided_slice %0 {offsets = [3, 0], sizes = [1, 128], strides = [1, 1]} : vector<6x128xf32> to vector<1x128xf32>
    %c15 = arith.constant 15 : index
    %112 = memref.load %arg1[%c15] : memref<63xf32, #tpu.memory_space<smem>>
    %113 = vector.broadcast %112 : f32 to vector<1x128xf32>
    %114 = arith.mulf %111, %113 : vector<1x128xf32>
    %115 = arith.addf %110, %114 : vector<1x128xf32>
    %116 = vector.extract_strided_slice %0 {offsets = [4, 0], sizes = [1, 128], strides = [1, 1]} : vector<6x128xf32> to vector<1x128xf32>
    %c19 = arith.constant 19 : index
    %117 = memref.load %arg1[%c19] : memref<63xf32, #tpu.memory_space<smem>>
    %118 = vector.broadcast %117 : f32 to vector<1x128xf32>
    %119 = arith.mulf %116, %118 : vector<1x128xf32>
    %120 = arith.addf %115, %119 : vector<1x128xf32>
    %121 = vector.extract_strided_slice %0 {offsets = [5, 0], sizes = [1, 128], strides = [1, 1]} : vector<6x128xf32> to vector<1x128xf32>
    %c23 = arith.constant 23 : index
    %122 = memref.load %arg1[%c23] : memref<63xf32, #tpu.memory_space<smem>>
    %123 = vector.broadcast %122 : f32 to vector<1x128xf32>
    %124 = arith.mulf %121, %123 : vector<1x128xf32>
    %125 = arith.addf %120, %124 : vector<1x128xf32>
    %c27 = arith.constant 27 : index
    %126 = memref.load %arg1[%c27] : memref<63xf32, #tpu.memory_space<smem>>
    %127 = vector.broadcast %126 : f32 to vector<1x128xf32>
    %128 = arith.addf %125, %127 : vector<1x128xf32>
    %c28 = arith.constant 28 : index
    %129 = memref.load %arg1[%c28] : memref<63xf32, #tpu.memory_space<smem>>
    %130 = vector.broadcast %129 : f32 to vector<1x128xf32>
    %131 = arith.mulf %32, %130 : vector<1x128xf32>
    %c29 = arith.constant 29 : index
    %132 = memref.load %arg1[%c29] : memref<63xf32, #tpu.memory_space<smem>>
    %133 = vector.broadcast %132 : f32 to vector<1x128xf32>
    %134 = arith.mulf %64, %133 : vector<1x128xf32>
    %135 = arith.addf %131, %134 : vector<1x128xf32>
    %c30 = arith.constant 30 : index
    %136 = memref.load %arg1[%c30] : memref<63xf32, #tpu.memory_space<smem>>
    %137 = vector.broadcast %136 : f32 to vector<1x128xf32>
    %138 = arith.mulf %96, %137 : vector<1x128xf32>
    %139 = arith.addf %135, %138 : vector<1x128xf32>
    %c31 = arith.constant 31 : index
    %140 = memref.load %arg1[%c31] : memref<63xf32, #tpu.memory_space<smem>>
    %141 = vector.broadcast %140 : f32 to vector<1x128xf32>
    %142 = arith.mulf %128, %141 : vector<1x128xf32>
    %143 = arith.addf %139, %142 : vector<1x128xf32>
    %c32 = arith.constant 32 : index
    %144 = memref.load %arg1[%c32] : memref<63xf32, #tpu.memory_space<smem>>
    %145 = vector.broadcast %144 : f32 to vector<1x128xf32>
    %146 = arith.addf %143, %145 : vector<1x128xf32>
    %cst = arith.constant 0.000000e+00 : f32
    %147 = vector.broadcast %cst : f32 to vector<1x128xf32>
    %148 = arith.maximumf %146, %147 : vector<1x128xf32>
    %c33 = arith.constant 33 : index
    %149 = memref.load %arg1[%c33] : memref<63xf32, #tpu.memory_space<smem>>
    %150 = vector.broadcast %149 : f32 to vector<1x128xf32>
    %151 = arith.mulf %148, %150 : vector<1x128xf32>
    %c36 = arith.constant 36 : index
    %152 = memref.load %arg1[%c36] : memref<63xf32, #tpu.memory_space<smem>>
    %153 = vector.broadcast %152 : f32 to vector<1x128xf32>
    %154 = arith.addf %151, %153 : vector<1x128xf32>
    %155 = arith.negf %154 : vector<1x128xf32>
    %156 = math.exp %155 : vector<1x128xf32>
    %cst_2 = arith.constant 1.000000e+00 : f32
    %157 = vector.broadcast %cst_2 : f32 to vector<1x128xf32>
    %158 = arith.addf %157, %156 : vector<1x128xf32>
    %159 = arith.divf %157, %158 : vector<1x128xf32>
    %c34 = arith.constant 34 : index
    %160 = memref.load %arg1[%c34] : memref<63xf32, #tpu.memory_space<smem>>
    %161 = vector.broadcast %160 : f32 to vector<1x128xf32>
    %162 = arith.mulf %148, %161 : vector<1x128xf32>
    %c37 = arith.constant 37 : index
    %163 = memref.load %arg1[%c37] : memref<63xf32, #tpu.memory_space<smem>>
    %164 = vector.broadcast %163 : f32 to vector<1x128xf32>
    %165 = arith.addf %162, %164 : vector<1x128xf32>
    %166 = arith.negf %165 : vector<1x128xf32>
    %167 = math.exp %166 : vector<1x128xf32>
    %cst_3 = arith.constant 1.000000e+00 : f32
    %168 = vector.broadcast %cst_3 : f32 to vector<1x128xf32>
    %169 = arith.addf %168, %167 : vector<1x128xf32>
    %170 = arith.divf %168, %169 : vector<1x128xf32>
    %c35 = arith.constant 35 : index
    %171 = memref.load %arg1[%c35] : memref<63xf32, #tpu.memory_space<smem>>
    %172 = vector.broadcast %171 : f32 to vector<1x128xf32>
    %173 = arith.mulf %148, %172 : vector<1x128xf32>
    %c38 = arith.constant 38 : index
    %174 = memref.load %arg1[%c38] : memref<63xf32, #tpu.memory_space<smem>>
    %175 = vector.broadcast %174 : f32 to vector<1x128xf32>
    %176 = arith.addf %173, %175 : vector<1x128xf32>
    %177 = arith.negf %176 : vector<1x128xf32>
    %178 = math.exp %177 : vector<1x128xf32>
    %cst_4 = arith.constant 1.000000e+00 : f32
    %179 = vector.broadcast %cst_4 : f32 to vector<1x128xf32>
    %180 = arith.addf %179, %178 : vector<1x128xf32>
    %181 = arith.divf %179, %180 : vector<1x128xf32>
    %c39 = arith.constant 39 : index
    %182 = memref.load %arg1[%c39] : memref<63xf32, #tpu.memory_space<smem>>
    %183 = vector.broadcast %182 : f32 to vector<1x128xf32>
    %184 = arith.mulf %159, %183 : vector<1x128xf32>
    %c45 = arith.constant 45 : index
    %185 = memref.load %arg1[%c45] : memref<63xf32, #tpu.memory_space<smem>>
    %186 = vector.broadcast %185 : f32 to vector<1x128xf32>
    %187 = arith.mulf %170, %186 : vector<1x128xf32>
    %188 = arith.addf %184, %187 : vector<1x128xf32>
    %c51 = arith.constant 51 : index
    %189 = memref.load %arg1[%c51] : memref<63xf32, #tpu.memory_space<smem>>
    %190 = vector.broadcast %189 : f32 to vector<1x128xf32>
    %191 = arith.mulf %181, %190 : vector<1x128xf32>
    %192 = arith.addf %188, %191 : vector<1x128xf32>
    %c57 = arith.constant 57 : index
    %193 = memref.load %arg1[%c57] : memref<63xf32, #tpu.memory_space<smem>>
    %194 = vector.broadcast %193 : f32 to vector<1x128xf32>
    %195 = arith.addf %192, %194 : vector<1x128xf32>
    %c40 = arith.constant 40 : index
    %196 = memref.load %arg1[%c40] : memref<63xf32, #tpu.memory_space<smem>>
    %197 = vector.broadcast %196 : f32 to vector<1x128xf32>
    %198 = arith.mulf %159, %197 : vector<1x128xf32>
    %c46 = arith.constant 46 : index
    %199 = memref.load %arg1[%c46] : memref<63xf32, #tpu.memory_space<smem>>
    %200 = vector.broadcast %199 : f32 to vector<1x128xf32>
    %201 = arith.mulf %170, %200 : vector<1x128xf32>
    %202 = arith.addf %198, %201 : vector<1x128xf32>
    %c52 = arith.constant 52 : index
    %203 = memref.load %arg1[%c52] : memref<63xf32, #tpu.memory_space<smem>>
    %204 = vector.broadcast %203 : f32 to vector<1x128xf32>
    %205 = arith.mulf %181, %204 : vector<1x128xf32>
    %206 = arith.addf %202, %205 : vector<1x128xf32>
    %c58 = arith.constant 58 : index
    %207 = memref.load %arg1[%c58] : memref<63xf32, #tpu.memory_space<smem>>
    %208 = vector.broadcast %207 : f32 to vector<1x128xf32>
    %209 = arith.addf %206, %208 : vector<1x128xf32>
    %c41 = arith.constant 41 : index
    %210 = memref.load %arg1[%c41] : memref<63xf32, #tpu.memory_space<smem>>
    %211 = vector.broadcast %210 : f32 to vector<1x128xf32>
    %212 = arith.mulf %159, %211 : vector<1x128xf32>
    %c47 = arith.constant 47 : index
    %213 = memref.load %arg1[%c47] : memref<63xf32, #tpu.memory_space<smem>>
    %214 = vector.broadcast %213 : f32 to vector<1x128xf32>
    %215 = arith.mulf %170, %214 : vector<1x128xf32>
    %216 = arith.addf %212, %215 : vector<1x128xf32>
    %c53 = arith.constant 53 : index
    %217 = memref.load %arg1[%c53] : memref<63xf32, #tpu.memory_space<smem>>
    %218 = vector.broadcast %217 : f32 to vector<1x128xf32>
    %219 = arith.mulf %181, %218 : vector<1x128xf32>
    %220 = arith.addf %216, %219 : vector<1x128xf32>
    %c59 = arith.constant 59 : index
    %221 = memref.load %arg1[%c59] : memref<63xf32, #tpu.memory_space<smem>>
    %222 = vector.broadcast %221 : f32 to vector<1x128xf32>
    %223 = arith.addf %220, %222 : vector<1x128xf32>
    %c42 = arith.constant 42 : index
    %224 = memref.load %arg1[%c42] : memref<63xf32, #tpu.memory_space<smem>>
    %225 = vector.broadcast %224 : f32 to vector<1x128xf32>
    %226 = arith.mulf %159, %225 : vector<1x128xf32>
    %c48 = arith.constant 48 : index
    %227 = memref.load %arg1[%c48] : memref<63xf32, #tpu.memory_space<smem>>
    %228 = vector.broadcast %227 : f32 to vector<1x128xf32>
    %229 = arith.mulf %170, %228 : vector<1x128xf32>
    %230 = arith.addf %226, %229 : vector<1x128xf32>
    %c54 = arith.constant 54 : index
    %231 = memref.load %arg1[%c54] : memref<63xf32, #tpu.memory_space<smem>>
    %232 = vector.broadcast %231 : f32 to vector<1x128xf32>
    %233 = arith.mulf %181, %232 : vector<1x128xf32>
    %234 = arith.addf %230, %233 : vector<1x128xf32>
    %c60 = arith.constant 60 : index
    %235 = memref.load %arg1[%c60] : memref<63xf32, #tpu.memory_space<smem>>
    %236 = vector.broadcast %235 : f32 to vector<1x128xf32>
    %237 = arith.addf %234, %236 : vector<1x128xf32>
    %c43 = arith.constant 43 : index
    %238 = memref.load %arg1[%c43] : memref<63xf32, #tpu.memory_space<smem>>
    %239 = vector.broadcast %238 : f32 to vector<1x128xf32>
    %240 = arith.mulf %159, %239 : vector<1x128xf32>
    %c49 = arith.constant 49 : index
    %241 = memref.load %arg1[%c49] : memref<63xf32, #tpu.memory_space<smem>>
    %242 = vector.broadcast %241 : f32 to vector<1x128xf32>
    %243 = arith.mulf %170, %242 : vector<1x128xf32>
    %244 = arith.addf %240, %243 : vector<1x128xf32>
    %c55 = arith.constant 55 : index
    %245 = memref.load %arg1[%c55] : memref<63xf32, #tpu.memory_space<smem>>
    %246 = vector.broadcast %245 : f32 to vector<1x128xf32>
    %247 = arith.mulf %181, %246 : vector<1x128xf32>
    %248 = arith.addf %244, %247 : vector<1x128xf32>
    %c61 = arith.constant 61 : index
    %249 = memref.load %arg1[%c61] : memref<63xf32, #tpu.memory_space<smem>>
    %250 = vector.broadcast %249 : f32 to vector<1x128xf32>
    %251 = arith.addf %248, %250 : vector<1x128xf32>
    %c44 = arith.constant 44 : index
    %252 = memref.load %arg1[%c44] : memref<63xf32, #tpu.memory_space<smem>>
    %253 = vector.broadcast %252 : f32 to vector<1x128xf32>
    %254 = arith.mulf %159, %253 : vector<1x128xf32>
    %c50 = arith.constant 50 : index
    %255 = memref.load %arg1[%c50] : memref<63xf32, #tpu.memory_space<smem>>
    %256 = vector.broadcast %255 : f32 to vector<1x128xf32>
    %257 = arith.mulf %170, %256 : vector<1x128xf32>
    %258 = arith.addf %254, %257 : vector<1x128xf32>
    %c56 = arith.constant 56 : index
    %259 = memref.load %arg1[%c56] : memref<63xf32, #tpu.memory_space<smem>>
    %260 = vector.broadcast %259 : f32 to vector<1x128xf32>
    %261 = arith.mulf %181, %260 : vector<1x128xf32>
    %262 = arith.addf %258, %261 : vector<1x128xf32>
    %c62 = arith.constant 62 : index
    %263 = memref.load %arg1[%c62] : memref<63xf32, #tpu.memory_space<smem>>
    %264 = vector.broadcast %263 : f32 to vector<1x128xf32>
    %265 = arith.addf %262, %264 : vector<1x128xf32>
    %266 = tpu.concatenate %195, %209, %223, %237, %251, %265 in 0 : vector<1x128xf32>, vector<1x128xf32>, vector<1x128xf32>, vector<1x128xf32>, vector<1x128xf32>, vector<1x128xf32> -> vector<6x128xf32>
    %c0_5 = arith.constant 0 : index
    %c0_6 = arith.constant 0 : index
    %267 = vector.load %arg3[%c0_5, %c0_6] : memref<6x128xf32, #tpu.memory_space<vmem>>, vector<6x128xf32>
    tpu.vector_store %arg3[%c0_5, %c0_6], %266 {strides = array<i32>} : memref<6x128xf32, #tpu.memory_space<vmem>>, vector<6x128xf32>,
    return
  }
  func.func @transform_0(%arg0: i32) -> i32 {
    %c0_i32 = arith.constant 0 : i32
    %c0_i32_0 = arith.constant 0 : i32
    return %c0_i32 : i32
  }
  func.func @transform_1(%arg0: i32) -> (i32, i32) {
    %c0_i32 = arith.constant 0 : i32
    %c0_i32_0 = arith.constant 0 : i32
    return %c0_i32, %arg0 : i32, i32
  }
  func.func @transform_2(%arg0: i32) -> (i32, i32) {
    %c0_i32 = arith.constant 0 : i32
    %c0_i32_0 = arith.constant 0 : i32
    return %c0_i32, %arg0 : i32, i32
  }
}

</mosaic_0001>

<llo_original>
// kernel: tpu_custom_call.1
$region0: #{tpu_custom_call.1}
  #allocation0 [shape = 'u32[]', space=smem, size = 0x4, offset = 0x4, fixed_abs, tag = 'smem constant byte address 0x4 - core index']
  #allocation1 [shape = 'u32[144,128]{1,0:T(1,128)}', space=vmem, size = 0x12000, scoped, tag = 'internal scratch']
  %s0 = inlined_call_operand.hbm [shape: f32[63], index: 0, kind: input, shape index: {}]
  %s1 = inlined_call_operand.hbm [shape: f32[6,128], index: 1, kind: input, shape index: {}]
  %s2 = inlined_call_operand.hbm [shape: f32[6,128], index: 2, kind: output, shape index: {}]
  %s3 = sld [smem:[#allocation0]]
  $region26: #{tpu_custom_call.1} parent=0
    _
  %s5 = ssub.s32 1, %s3
  %s6 = scalar_select 0, %s5, %s3
  $region1: #{tpu_custom_call.1} parent=0
    #allocation2 [shape = 'u8[512]{0}', space=smem, size = 0x200, scoped, tag = 'input window, operand 0, single buffered']
    #allocation3 [shape = 's32[1]{0}', space=sflag, size = 0x4, scoped, tag = 'scoped memory for tpu_custom_call.1']
    #allocation4 [shape = 's32[1]{0}', space=sflag, size = 0x4, scoped, tag = 'scoped memory for tpu_custom_call.1']
    #allocation5 [shape = 's32[1]{0}', space=sflag, size = 0x4, scoped, tag = 'scoped memory for tpu_custom_call.1']
    #allocation6 [shape = 'u8[4096]{0}', space=vmem, size = 0x1000, scoped, tag = 'input window, operand 1, single buffered']
    #allocation7 [shape = 'u8[4096]{0}', space=vmem, size = 0x1000, scoped, tag = 'output window, operand 0, single buffered']
    %7 = vsyncpa [#allocation5], 0
    %8 = vsyncpa [#allocation3], 0
    %9 = vsyncpa [#allocation4], 0
    // Predicated region
    $region2: #{tpu_custom_call.1} parent=1 // pred_check
      _
    $region3: #{tpu_custom_call.1} parent=1 // pred_check_branch
      %11 = sbr.rel (0) target = $region5
    $region4: #{tpu_custom_call.1} parent=1 // pred_region
      %s13 = ssub.s32 16, 16
      %14 = vsyncadd [#allocation5], %s13
      %17 = dma.hbm_to_smem %s0, 16, [#allocation2], [#allocation5]
    $region5: #{tpu_custom_call.1} parent=1 // pred_fallthru
      _
    // Predicated region
    $region6: #{tpu_custom_call.1} parent=1 // pred_check
      _
    $region7: #{tpu_custom_call.1} parent=1 // pred_check_branch
      %19 = sbr.rel (0) target = $region9
    $region8: #{tpu_custom_call.1} parent=1 // pred_region
      %s21 = ssub.s32 128, 128
      %22 = vsyncadd [#allocation3], %s21
      %s24 = sshll.u32 [#allocation6], 4
      %s25 = int_to_ptr.vmem [resolvable:$true] %s24
      %27 = dma.hbm_to_vmem [thread:$0]  %s1, 128, %s25, [#allocation3]
    $region9: #{tpu_custom_call.1} parent=1 // pred_fallthru
      _
    // Predicated region
    $region10: #{tpu_custom_call.1} parent=1 // pred_check
      _
    $region11: #{tpu_custom_call.1} parent=1 // pred_check_branch
      %29 = sbr.rel (0) target = $region13
    $region12: #{tpu_custom_call.1} parent=1 // pred_region
      %30 = dma.done [#allocation5], 16
    $region13: #{tpu_custom_call.1} parent=1 // pred_fallthru
      _
    // Predicated region
    $region14: #{tpu_custom_call.1} parent=1 // pred_check
      _
    $region15: #{tpu_custom_call.1} parent=1 // pred_check_branch
      %32 = sbr.rel (0) target = $region17
    $region16: #{tpu_custom_call.1} parent=1 // pred_region
      %33 = dma.done [#allocation3], 128
    $region17: #{tpu_custom_call.1} parent=1 // pred_fallthru
      _
    %34 = sfence
    %v35 = vld [vmem:[#allocation6] sm:$0x3f]
    %s36 = sld [smem:[#allocation2]]
    %v37 = vstv %s36
    %v38 = vmul.f32 %v35, %v37
    %s39 = sld [smem:[#allocation2 + $0x4]]
    %v40 = vstv %s39
    %v41 = vmul.f32 %v35, %v40
    %v43 = vrot.slane %v41, 1
    %v45 = vadd.f32 %v38, %v43
    %s46 = sld [smem:[#allocation2 + $0x8]]
    %v47 = vstv %s46
    %v48 = vmul.f32 %v35, %v47
    %v50 = vrot.slane %v48, 2
    %v52 = vadd.f32 %v45, %v50
    %s53 = sld [smem:[#allocation2 + $0xc]]
    %v54 = vstv %s53
    %v55 = vmul.f32 %v35, %v54
    %v57 = vrot.slane %v55, 3
    %v59 = vadd.f32 %v52, %v57
    %s60 = sld [smem:[#allocation2 + $0x10]]
    %v61 = vstv %s60
    %v62 = vmul.f32 %v35, %v61
    %v64 = vrot.slane %v62, 4
    %v66 = vadd.f32 %v59, %v64
    %s67 = sld [smem:[#allocation2 + $0x14]]
    %v68 = vstv %s67
    %v69 = vmul.f32 %v35, %v68
    %v71 = vrot.slane %v69, 5
    %v73 = vadd.f32 %v66, %v71
    %s74 = sld [smem:[#allocation2 + $0x18]]
    %v75 = vstv %s74
    %v76 = vadd.f32 %v73, %v75
    %s77 = sld [smem:[#allocation2 + $0x1]]
    %v78 = vstv %s77
    %v79 = vmul.f32 %v35, %v78
    %s80 = sld [smem:[#allocation2 + $0x5]]
    %v81 = vstv %s80
    %v82 = vmul.f32 %v35, %v81
    %v84 = vrot.slane %v82, 1
    %v86 = vadd.f32 %v79, %v84
    %s87 = sld [smem:[#allocation2 + $0x9]]
    %v88 = vstv %s87
    %v89 = vmul.f32 %v35, %v88
    %v91 = vrot.slane %v89, 2
    %v93 = vadd.f32 %v86, %v91
    %s94 = sld [smem:[#allocation2 + $0xd]]
    %v95 = vstv %s94
    %v96 = vmul.f32 %v35, %v95
    %v98 = vrot.slane %v96, 3
    %v100 = vadd.f32 %v93, %v98
    %s101 = sld [smem:[#allocation2 + $0x11]]
    %v102 = vstv %s101
    %v103 = vmul.f32 %v35, %v102
    %v105 = vrot.slane %v103, 4
    %v107 = vadd.f32 %v100, %v105
    %s108 = sld [smem:[#allocation2 + $0x15]]
    %v109 = vstv %s108
    %v110 = vmul.f32 %v35, %v109
    %v112 = vrot.slane %v110, 5
    %v114 = vadd.f32 %v107, %v112
    %s115 = sld [smem:[#allocation2 + $0x19]]
    %v116 = vstv %s115
    %v117 = vadd.f32 %v114, %v116
    %s118 = sld [smem:[#allocation2 + $0x2]]
    %v119 = vstv %s118
    %v120 = vmul.f32 %v35, %v119
    %s121 = sld [smem:[#allocation2 + $0x6]]
    %v122 = vstv %s121
    %v123 = vmul.f32 %v35, %v122
    %v125 = vrot.slane %v123, 1
    %v127 = vadd.f32 %v120, %v125
    %s128 = sld [smem:[#allocation2 + $0xa]]
    %v129 = vstv %s128
    %v130 = vmul.f32 %v35, %v129
    %v132 = vrot.slane %v130, 2
    %v134 = vadd.f32 %v127, %v132
    %s135 = sld [smem:[#allocation2 + $0xe]]
    %v136 = vstv %s135
    %v137 = vmul.f32 %v35, %v136
    %v139 = vrot.slane %v137, 3
    %v141 = vadd.f32 %v134, %v139
    %s142 = sld [smem:[#allocation2 + $0x12]]
    %v143 = vstv %s142
    %v144 = vmul.f32 %v35, %v143
    %v146 = vrot.slane %v144, 4
    %v148 = vadd.f32 %v141, %v146
    %s149 = sld [smem:[#allocation2 + $0x16]]
    %v150 = vstv %s149
    %v151 = vmul.f32 %v35, %v150
    %v153 = vrot.slane %v151, 5
    %v155 = vadd.f32 %v148, %v153
    %s156 = sld [smem:[#allocation2 + $0x1a]]
    %v157 = vstv %s156
    %v158 = vadd.f32 %v155, %v157
    %s159 = sld [smem:[#allocation2 + $0x3]]
    %v160 = vstv %s159
    %v161 = vmul.f32 %v35, %v160
    %s162 = sld [smem:[#allocation2 + $0x7]]
    %v163 = vstv %s162
    %v164 = vmul.f32 %v35, %v163
    %v166 = vrot.slane %v164, 1
    %v168 = vadd.f32 %v161, %v166
    %s169 = sld [smem:[#allocation2 + $0xb]]
    %v170 = vstv %s169
    %v171 = vmul.f32 %v35, %v170
    %v173 = vrot.slane %v171, 2
    %v175 = vadd.f32 %v168, %v173
    %s176 = sld [smem:[#allocation2 + $0xf]]
    %v177 = vstv %s176
    %v178 = vmul.f32 %v35, %v177
    %v180 = vrot.slane %v178, 3
    %v182 = vadd.f32 %v175, %v180
    %s183 = sld [smem:[#allocation2 + $0x13]]
    %v184 = vstv %s183
    %v185 = vmul.f32 %v35, %v184
    %v187 = vrot.slane %v185, 4
    %v189 = vadd.f32 %v182, %v187
    %s190 = sld [smem:[#allocation2 + $0x17]]
    %v191 = vstv %s190
    %v192 = vmul.f32 %v35, %v191
    %v194 = vrot.slane %v192, 5
    %v196 = vadd.f32 %v189, %v194
    %s197 = sld [smem:[#allocation2 + $0x1b]]
    %v198 = vstv %s197
    %v199 = vadd.f32 %v196, %v198
    %s200 = sld [smem:[#allocation2 + $0x1c]]
    %v201 = vstv %s200
    %v202 = vmul.f32 %v76, %v201
    %s203 = sld [smem:[#allocation2 + $0x1d]]
    %v204 = vstv %s203
    %v205 = vmul.f32 %v117, %v204
    %v206 = vadd.f32 %v202, %v205
    %s207 = sld [smem:[#allocation2 + $0x1e]]
    %v208 = vstv %s207
    %v209 = vmul.f32 %v158, %v208
    %v210 = vadd.f32 %v206, %v209
    %s211 = sld [smem:[#allocation2 + $0x1f]]
    %v212 = vstv %s211
    %v213 = vmul.f32 %v199, %v212
    %v214 = vadd.f32 %v210, %v213
    %s215 = sld [smem:[#allocation2 + $0x20]]
    %v216 = vstv %s215
    %v217 = vadd.f32 %v214, %v216
    %v218 = vmax.f32 %v217, 0.0
    %s219 = sld [smem:[#allocation2 + $0x21]]
    %v220 = vstv %s219
    %v221 = vmul.f32 %v218, %v220
    %s222 = sld [smem:[#allocation2 + $0x24]]
    %v223 = vstv %s222
    %v224 = vadd.f32 %v221, %v223
    %v225 = vxor.u32 %v224, 2147483648
    %v226 = vmul.f32 %v225, 1.442695
    %v227 = vpow.pop %v226
    %v228 = vadd.f32 %v227, 1.0
    %v229 = vrcp.pop %v228
    %v230 = vmul.f32 1.0, %v229
    %s231 = sld [smem:[#allocation2 + $0x22]]
    %v232 = vstv %s231
    %v233 = vmul.f32 %v218, %v232
    %s234 = sld [smem:[#allocation2 + $0x25]]
    %v235 = vstv %s234
    %v236 = vadd.f32 %v233, %v235
    %v237 = vxor.u32 %v236, 2147483648
    %v238 = vmul.f32 %v237, 1.442695
    %v239 = vpow.pop %v238
    %v240 = vadd.f32 %v239, 1.0
    %v241 = vrcp.pop %v240
    %v242 = vmul.f32 1.0, %v241
    %s243 = sld [smem:[#allocation2 + $0x23]]
    %v244 = vstv %s243
    %v245 = vmul.f32 %v218, %v244
    %s246 = sld [smem:[#allocation2 + $0x26]]
    %v247 = vstv %s246
    %v248 = vadd.f32 %v245, %v247
    %v249 = vxor.u32 %v248, 2147483648
    %v250 = vmul.f32 %v249, 1.442695
    %v251 = vpow.pop %v250
    %v252 = vadd.f32 %v251, 1.0
    %v253 = vrcp.pop %v252
    %v254 = vmul.f32 1.0, %v253
    %s255 = sld [smem:[#allocation2 + $0x27]]
    %v256 = vstv %s255
    %v257 = vmul.f32 %v230, %v256
    %s258 = sld [smem:[#allocation2 + $0x2d]]
    %v259 = vstv %s258
    %v260 = vmul.f32 %v242, %v259
    %v261 = vadd.f32 %v257, %v260
    %s262 = sld [smem:[#allocation2 + $0x33]]
    %v263 = vstv %s262
    %v264 = vmul.f32 %v254, %v263
    %v265 = vadd.f32 %v261, %v264
    %s266 = sld [smem:[#allocation2 + $0x39]]
    %v267 = vstv %s266
    %v268 = vadd.f32 %v265, %v267
    %s269 = sld [smem:[#allocation2 + $0x28]]
    %v270 = vstv %s269
    %v271 = vmul.f32 %v230, %v270
    %s272 = sld [smem:[#allocation2 + $0x2e]]
    %v273 = vstv %s272
    %v274 = vmul.f32 %v242, %v273
    %v275 = vadd.f32 %v271, %v274
    %s276 = sld [smem:[#allocation2 + $0x34]]
    %v277 = vstv %s276
    %v278 = vmul.f32 %v254, %v277
    %v279 = vadd.f32 %v275, %v278
    %s280 = sld [smem:[#allocation2 + $0x3a]]
    %v281 = vstv %s280
    %v282 = vadd.f32 %v279, %v281
    %s283 = sld [smem:[#allocation2 + $0x29]]
    %v284 = vstv %s283
    %v285 = vmul.f32 %v230, %v284
    %s286 = sld [smem:[#allocation2 + $0x2f]]
    %v287 = vstv %s286
    %v288 = vmul.f32 %v242, %v287
    %v289 = vadd.f32 %v285, %v288
    %s290 = sld [smem:[#allocation2 + $0x35]]
    %v291 = vstv %s290
    %v292 = vmul.f32 %v254, %v291
    %v293 = vadd.f32 %v289, %v292
    %s294 = sld [smem:[#allocation2 + $0x3b]]
    %v295 = vstv %s294
    %v296 = vadd.f32 %v293, %v295
    %s297 = sld [smem:[#allocation2 + $0x2a]]
    %v298 = vstv %s297
    %v299 = vmul.f32 %v230, %v298
    %s300 = sld [smem:[#allocation2 + $0x30]]
    %v301 = vstv %s300
    %v302 = vmul.f32 %v242, %v301
    %v303 = vadd.f32 %v299, %v302
    %s304 = sld [smem:[#allocation2 + $0x36]]
    %v305 = vstv %s304
    %v306 = vmul.f32 %v254, %v305
    %v307 = vadd.f32 %v303, %v306
    %s308 = sld [smem:[#allocation2 + $0x3c]]
    %v309 = vstv %s308
    %v310 = vadd.f32 %v307, %v309
    %s311 = sld [smem:[#allocation2 + $0x2b]]
    %v312 = vstv %s311
    %v313 = vmul.f32 %v230, %v312
    %s314 = sld [smem:[#allocation2 + $0x31]]
    %v315 = vstv %s314
    %v316 = vmul.f32 %v242, %v315
    %v317 = vadd.f32 %v313, %v316
    %s318 = sld [smem:[#allocation2 + $0x37]]
    %v319 = vstv %s318
    %v320 = vmul.f32 %v254, %v319
    %v321 = vadd.f32 %v317, %v320
    %s322 = sld [smem:[#allocation2 + $0x3d]]
    %v323 = vstv %s322
    %v324 = vadd.f32 %v321, %v323
    %s325 = sld [smem:[#allocation2 + $0x2c]]
    %v326 = vstv %s325
    %v327 = vmul.f32 %v230, %v326
    %s328 = sld [smem:[#allocation2 + $0x32]]
    %v329 = vstv %s328
    %v330 = vmul.f32 %v242, %v329
    %v331 = vadd.f32 %v327, %v330
    %s332 = sld [smem:[#allocation2 + $0x38]]
    %v333 = vstv %s332
    %v334 = vmul.f32 %v254, %v333
    %v335 = vadd.f32 %v331, %v334
    %s336 = sld [smem:[#allocation2 + $0x3e]]
    %v337 = vstv %s336
    %v338 = vadd.f32 %v335, %v337
    %v340 = vrot.slane %v282, 7
    %v343 = vrot.slane %v296, 6
    %v346 = vrot.slane %v310, 5
    %v349 = vrot.slane %v324, 4
    %v352 = vrot.slane %v338, 3
    %vm354 = vcmask 1040384
    %v355 = vsel %vm354, %v268, %v340
    %vm356 = vcmask 1041408
    %v357 = vsel %vm356, %v355, %v343
    %vm358 = vcmask 1042432
    %v359 = vsel %vm358, %v357, %v346
    %vm360 = vcmask 1043456
    %v361 = vsel %vm360, %v359, %v349
    %vm362 = vcmask 1044480
    %v363 = vsel %vm362, %v361, %v352
    %364 = vst [vmem:[#allocation7] sm:$0x3f] %v363
    // Predicated region
    $region18: #{tpu_custom_call.1} parent=1 // pred_check
      _
    $region19: #{tpu_custom_call.1} parent=1 // pred_check_branch
      %366 = sbr.rel (0) target = $region21
    $region20: #{tpu_custom_call.1} parent=1 // pred_region
      %s368 = ssub.s32 128, 128
      %369 = vsyncadd [#allocation4], %s368
      %s371 = sshll.u32 [#allocation7], 4
      %s372 = int_to_ptr.vmem [resolvable:$true] %s371
      %374 = dma.vmem_to_hbm [thread:$0]  %s372, 128, %s2, [#allocation4]
    $region21: #{tpu_custom_call.1} parent=1 // pred_fallthru
      _
    // Predicated region
    $region22: #{tpu_custom_call.1} parent=1 // pred_check
      _
    $region23: #{tpu_custom_call.1} parent=1 // pred_check_branch
      %376 = sbr.rel (0) target = $region25
    $region24: #{tpu_custom_call.1} parent=1 // pred_region
      %377 = dma.done [#allocation4], 128
    $region25: #{tpu_custom_call.1} parent=1 // pred_fallthru
      _
    %378 = vsyncpa [#allocation3], 1
    %379 = vsyncpa [#allocation4], 1
    %380 = vsyncpa [#allocation5], 1

</llo_original>
